<compile_context>
chip_gen: v5e
topology: v5e:2x2
jax: 0.10.0
libtpu: 0.0.40
codegen_flags: <defaults>
</compile_context>

<pallas_src>
import functools

import jax
import jax.numpy as jnp
import numpy as np
from jax.experimental import pallas as pl
from jax.experimental.pallas import tpu as pltpu


def conv_bn_act_kernel(xp_ref, w_ref, b_ref, out_ref, *,
                       TH, W, KH, KW, ph, pw, cout, has_residual, per_tap):
    """Grid step = (one image n, one tile of TH output rows h).

    xp_ref : (1, H+2*ph, W+2*pw, Cin)  zero-padded NHWC input (whole image;
             index constant over the h axis -> DMA'd once per image).
    w_ref  : per_tap: (KH*KW, Cin, Cout_p)   BN-folded weight taps
             im2col : (KH*KW*Cin, Cout_p)    BN-folded im2col weight
    b_ref  : (1, Cout)                       BN-folded bias (f32, unpadded)
    out_ref: (1, TH, W, Cout)                unpadded output tile
    """
    cin = xp_ref.shape[-1]
    cout_p = w_ref.shape[-1]
    M = TH * W
    h0 = pl.program_id(1) * TH          # top row of this tile (padded coords)

    res = None
    if per_tap:
        # Per-tap accumulation: no KH*KW*Cin concat intermediate in VMEM, no
        # lane-misaligned concat shuffles; K = Cin keeps the MXU deep enough
        # for Cin >= 128.  Weight pushes (KH*KW of them) are negligible vs M.
        acc = jnp.zeros((M, cout_p), jnp.float32)
        tap = 0
        for kh in range(KH):
            for kw in range(KW):
                win = xp_ref[:, pl.ds(h0 + kh, TH), pl.ds(kw, W), :]
                win2d = win.reshape(M, cin)
                if has_residual and kh == ph and kw == pw:
                    # Reuse the center tap as the residual (already resident).
                    res = win2d.astype(jnp.float32)
                acc = acc + jnp.dot(win2d, w_ref[tap],
                                    preferred_element_type=jnp.float32)
                tap += 1
    else:
        # Small-Cin (stem-like) path: one big-K matmul, K = KH*KW*Cin, so the
        # MXU is not fed a tiny per-tap K.
        cols = []
        for kh in range(KH):
            for kw in range(KW):
                win = xp_ref[:, pl.ds(h0 + kh, TH), pl.ds(kw, W), :]
                cols.append(win)
                if has_residual and kh == ph and kw == pw:
                    res = win.reshape(M, cin).astype(jnp.float32)
        patches = jnp.concatenate(cols, axis=-1).reshape(M, KH * KW * cin)
        acc = jnp.dot(patches, w_ref[...], preferred_element_type=jnp.float32)

    # f32 epilogue: drop the matmul-N channel pad, folded-BN bias, ReLU.
    if cout_p != cout:
        acc = acc[:, :cout]
    y = jnp.maximum(acc + b_ref[...], 0.0)

    if has_residual:
        # has_residual => Cin == Cout; residual adds only real lanes (no
        # zero-padded columns are allocated or streamed).  Note: in bf16 mode
        # the residual is read from the bf16-cast input (small extra rounding
        # vs the f32 PyTorch shortcut).
        y = y + res

    out_ref[...] = y.reshape(1, TH, W, cout).astype(out_ref.dtype)


def conv_bn_act(x_nchw, w_hwio, bn_params, *, stride=1, dilation=1, skip=False,
                eps=1e-5, compute_dtype=jnp.bfloat16, out_dtype=None,
                tile_rows=None, per_tap_min_cin=64):
    """ConvBnAct forward (eval mode). x_nchw: (N, Cin, H, W), w_hwio: (KH, KW, Cin, Cout)."""
    if stride != 1 or dilation != 1:
        # TODO(synk): strided / dilated conv variants not implemented.
        raise NotImplementedError("only stride=1, dilation=1 is implemented")

    gamma, beta, mean, var = [jnp.asarray(p, jnp.float32) for p in bn_params]
    N, Cin, H, W = x_nchw.shape
    KH, KW, wcin, Cout = w_hwio.shape
    assert wcin == Cin
    # "Same" padding via (K-1)//2 is only correct for odd kernel sizes.
    assert KH % 2 == 1 and KW % 2 == 1, "only odd kernel sizes are supported"
    ph, pw = (KH - 1) // 2, (KW - 1) // 2
    has_residual = bool(skip and stride == 1 and Cin == Cout)
    if out_dtype is None:
        out_dtype = compute_dtype

    # Fold eval-mode BN into the conv weight and a single bias vector.
    # (Scale is folded before the narrow-dtype cast; accuracy-critical layers
    # could instead keep the weight unscaled and apply scale in the epilogue.)
    scale = gamma * jax.lax.rsqrt(var + eps)
    bias = beta - mean * scale
    w_f32 = w_hwio.astype(jnp.float32) * scale[None, None, None, :]

    # Pad Cout only for the in-VMEM matmul N dim (weight side); the HBM
    # output stays unpadded (masked store beats a Cout_p/Cout x writeback).
    Cout_p = ((Cout + 127) // 128) * 128
    w_pad = jnp.pad(w_f32, ((0, 0), (0, 0), (0, 0), (0, Cout_p - Cout)))

    per_tap = Cin >= per_tap_min_cin
    if per_tap:
        wmat = w_pad.reshape(KH * KW, Cin, Cout_p).astype(compute_dtype)
        w_spec = pl.BlockSpec((KH * KW, Cin, Cout_p), lambda n, h: (0, 0, 0))
    else:
        wmat = w_pad.reshape(KH * KW * Cin, Cout_p).astype(compute_dtype)
        w_spec = pl.BlockSpec((KH * KW * Cin, Cout_p), lambda n, h: (0, 0))
    bvec = bias.reshape(1, Cout)                     # f32, unpadded

    # NCHW -> NHWC, spatial zero pad, narrow-dtype cast.  Single input stream:
    # the residual is read from the interior of this same padded block.
    xp = jnp.pad(jnp.transpose(x_nchw, (0, 2, 3, 1)),
                 ((0, 0), (ph, ph), (pw, pw), (0, 0))).astype(compute_dtype)
    Hp, Wp = H + 2 * ph, W + 2 * pw

    # Spatial row-tile so batch-1 workloads still pipeline / dual-TC shard and
    # the f32 accumulator + output tile stay small.
    if tile_rows is None:
        tile_rows = 1
        for th in range(H, 0, -1):
            if H % th == 0 and th * W <= 2048:
                tile_rows = th
                break
    assert H % tile_rows == 0, "tile_rows must divide H"
    TH = tile_rows
    num_h = H // TH

    # Explicit VMEM budget (v5e default scope 16 MiB, v7x physical 64 MiB).
    cbytes = jnp.dtype(compute_dtype).itemsize
    obytes = jnp.dtype(out_dtype).itemsize
    est = (2 * Hp * Wp * Cin * cbytes                 # double-buffered input
           + 2 * TH * W * Cout * obytes               # double-buffered output
           + 2 * int(wmat.size) * cbytes + 8 * Cout   # weight + bias
           + 4 * TH * W * Cout_p * 4)                 # f32 acc / epilogue temps
    vmem_limit = int(min(max(2 * est, 32 << 20), 48 << 20))

    kernel = functools.partial(
        conv_bn_act_kernel, TH=TH, W=W, KH=KH, KW=KW, ph=ph, pw=pw,
        cout=Cout, has_residual=has_residual, per_tap=per_tap)

    out = pl.pallas_call(
        kernel,
        out_shape=jax.ShapeDtypeStruct((N, H, W, Cout), out_dtype),
        grid_spec=pltpu.PrefetchScalarGridSpec(
            num_scalar_prefetch=0,
            grid=(N, num_h),                          # (image, row tile)
            in_specs=[
                # Whole padded image; index constant over h -> one DMA per n.
                pl.BlockSpec((1, Hp, Wp, Cin), lambda n, h: (n, 0, 0, 0)),
                # Constant-index weight / bias (DMA'd once; for very large
                # Cin*Cout use pipeline_mode=pl.Buffered(1) to halve residency).
                w_spec,
                pl.BlockSpec((1, Cout), lambda n, h: (0, 0)),
            ],
            out_specs=pl.BlockSpec((1, TH, W, Cout), lambda n, h: (n, h, 0, 0)),
        ),
        compiler_params=pltpu.CompilerParams(
            dimension_semantics=("parallel", "parallel"),   # megacore / dual-TC
            vmem_limit_bytes=vmem_limit),
    )(xp, wmat, bvec)

    return jnp.transpose(out, (0, 3, 1, 2))           # NHWC -> NCHW


def reference(x_nchw, w_hwio, bn_params, *, skip=False, eps=1e-5):
    """Pure-JAX (f32) reference of the PyTorch forward (eval-mode BN)."""
    gamma, beta, mean, var = [jnp.asarray(p, jnp.float32) for p in bn_params]
    w_oihw = jnp.transpose(w_hwio, (3, 2, 0, 1))
    y = jax.lax.conv_general_dilated(
        x_nchw, w_oihw, window_strides=(1, 1), padding='SAME',
        dimension_numbers=('NCHW', 'OIHW', 'NCHW'))
    y = (y - mean[None, :, None, None]) / jnp.sqrt(var + eps)[None, :, None, None]
    y = y * gamma[None, :, None, None] + beta[None, :, None, None]
    y = jnp.maximum(y, 0.0)
    if skip and x_nchw.shape[1] == w_hwio.shape[3]:
        y = y + x_nchw
    return y


if __name__ == "__main__":
    key = jax.random.PRNGKey(0)

    def make_case(k, N, Cin, Cout, H, W, K, wscale):
        ks = jax.random.split(k, 6)
        x = jax.random.normal(ks[0], (N, Cin, H, W), jnp.float32)
        w = jax.random.normal(ks[1], (K, K, Cin, Cout), jnp.float32) * wscale
        bn = (jax.random.normal(ks[2], (Cout,)) * 0.1 + 1.0,                    # gamma
              jax.random.normal(ks[3], (Cout,)) * 0.1,                          # beta
              jax.random.normal(ks[4], (Cout,)) * 0.1,                          # running_mean
              jax.random.uniform(ks[5], (Cout,), minval=0.5, maxval=1.5))       # running_var
        return x, w, bn

    to_np = lambda a: np.asarray(jnp.asarray(a, jnp.float32))
    keys = jax.random.split(key, 8)

    # 1) Small-Cin big-K (im2col) path, f32 compute, tight check; exercises the
    #    spatial row-tile grid and both skip configurations.
    x, w, bn = make_case(keys[0], 2, 4, 4, 16, 16, 3, 0.2)
    for skip, tr in ((False, 4), (True, None)):
        out = jax.block_until_ready(
            conv_bn_act(x, w, bn, skip=skip, compute_dtype=jnp.float32,
                        tile_rows=tr))
        np.testing.assert_allclose(to_np(out), to_np(reference(x, w, bn, skip=skip)),
                                   rtol=1e-4, atol=1e-4)

    # 2) Cin != Cout with Cout not a multiple of 128 (matmul-N pad + unpadded
    #    masked store), 1x1 kernel, no residual possible.
    x, w, bn = make_case(keys[1], 2, 8, 24, 16, 16, 1, 0.3)
    out = jax.block_until_ready(
        conv_bn_act(x, w, bn, skip=True, compute_dtype=jnp.float32))
    np.testing.assert_allclose(to_np(out), to_np(reference(x, w, bn, skip=True)),
                               rtol=1e-4, atol=1e-4)

    # 3) Large-Cin per-tap accumulation path, f32 compute, residual on,
    #    multi-row-tile grid at batch 1.
    x, w, bn = make_case(keys[2], 1, 128, 128, 16, 16, 3, 0.05)
    out = jax.block_until_ready(
        conv_bn_act(x, w, bn, skip=True, compute_dtype=jnp.float32, tile_rows=8))
    np.testing.assert_allclose(to_np(out), to_np(reference(x, w, bn, skip=True)),
                               rtol=1e-4, atol=1e-4)

    # 4) bf16 fast path (perf default: bf16 operands + bf16 store, f32 acc).
    x, w, bn = make_case(keys[3], 2, 4, 4, 16, 16, 3, 0.2)
    out = jax.block_until_ready(conv_bn_act(x, w, bn, skip=True))
    np.testing.assert_allclose(to_np(out), to_np(reference(x, w, bn, skip=True)),
                               rtol=5e-2, atol=5e-2)

    x, w, bn = make_case(keys[4], 1, 128, 128, 16, 16, 3, 0.05)
    out = jax.block_until_ready(conv_bn_act(x, w, bn, skip=True, tile_rows=8))
    np.testing.assert_allclose(to_np(out), to_np(reference(x, w, bn, skip=True)),
                               rtol=5e-2, atol=5e-2)

    print("KERNEL_OK")
</pallas_src>

<mosaic_0001>
module attributes {stable_mosaic.version = 11 : i64} {
  func.func @conv_bn_act_kernel(%arg0: i32, %arg1: i32, %arg2: memref<1x18x18x4xf32, #tpu.memory_space<vmem>>, %arg3: memref<36x128xf32, #tpu.memory_space<vmem>>, %arg4: memref<1x4xf32, #tpu.memory_space<vmem>>, %arg5: memref<1x4x16x4xf32, #tpu.memory_space<vmem>>) attributes {dimension_semantics = [#tpu.dimension_semantics<parallel>, #tpu.dimension_semantics<parallel>], iteration_bounds = array<i64: 2, 4>, scalar_prefetch = 0 : i64, scratch_operands = 0 : i64, tpu.core_type = #tpu.core_type<tc>, window_params = [{transform_indices = @transform_0, window_bounds = array<i64: 1, 18, 18, 4>}, {pipeline_mode = #tpu.pipeline_mode<synchronous>, transform_indices = @transform_1, window_bounds = array<i64: 36, 128>}, {pipeline_mode = #tpu.pipeline_mode<synchronous>, transform_indices = @transform_2, window_bounds = array<i64: 1, 4>}, {transform_indices = @transform_3, window_bounds = array<i64: 1, 4, 16, 4>}]} {
    %c4_i32 = arith.constant 4 : i32
    %0 = arith.muli %arg1, %c4_i32 : i32
    %c0_i32 = arith.constant 0 : i32
    %1 = arith.addi %0, %c0_i32 : i32
    %c0 = arith.constant 0 : index
    %2 = arith.index_cast %1 : i32 to index
    %c0_0 = arith.constant 0 : index
    %c0_1 = arith.constant 0 : index
    %3 = vector.load %arg2[%c0, %2, %c0_0, %c0_1] : memref<1x18x18x4xf32, #tpu.memory_space<vmem>>, vector<1x4x16x4xf32>
    %c0_i32_2 = arith.constant 0 : i32
    %4 = arith.addi %0, %c0_i32_2 : i32
    %c0_3 = arith.constant 0 : index
    %5 = arith.index_cast %4 : i32 to index
    %c1 = arith.constant 1 : index
    %c0_4 = arith.constant 0 : index
    %6 = vector.load %arg2[%c0_3, %5, %c1, %c0_4] : memref<1x18x18x4xf32, #tpu.memory_space<vmem>>, vector<1x4x16x4xf32>
    %c0_i32_5 = arith.constant 0 : i32
    %7 = arith.addi %0, %c0_i32_5 : i32
    %c0_6 = arith.constant 0 : index
    %8 = arith.index_cast %7 : i32 to index
    %c2 = arith.constant 2 : index
    %c0_7 = arith.constant 0 : index
    %9 = vector.load %arg2[%c0_6, %8, %c2, %c0_7] : memref<1x18x18x4xf32, #tpu.memory_space<vmem>>, vector<1x4x16x4xf32>
    %c1_i32 = arith.constant 1 : i32
    %10 = arith.addi %0, %c1_i32 : i32
    %c0_8 = arith.constant 0 : index
    %11 = arith.index_cast %10 : i32 to index
    %c0_9 = arith.constant 0 : index
    %c0_10 = arith.constant 0 : index
    %12 = vector.load %arg2[%c0_8, %11, %c0_9, %c0_10] : memref<1x18x18x4xf32, #tpu.memory_space<vmem>>, vector<1x4x16x4xf32>
    %c1_i32_11 = arith.constant 1 : i32
    %13 = arith.addi %0, %c1_i32_11 : i32
    %c0_12 = arith.constant 0 : index
    %14 = arith.index_cast %13 : i32 to index
    %c1_13 = arith.constant 1 : index
    %c0_14 = arith.constant 0 : index
    %15 = vector.load %arg2[%c0_12, %14, %c1_13, %c0_14] : memref<1x18x18x4xf32, #tpu.memory_space<vmem>>, vector<1x4x16x4xf32>
    %c1_i32_15 = arith.constant 1 : i32
    %16 = arith.addi %0, %c1_i32_15 : i32
    %c0_16 = arith.constant 0 : index
    %17 = arith.index_cast %16 : i32 to index
    %c2_17 = arith.constant 2 : index
    %c0_18 = arith.constant 0 : index
    %18 = vector.load %arg2[%c0_16, %17, %c2_17, %c0_18] : memref<1x18x18x4xf32, #tpu.memory_space<vmem>>, vector<1x4x16x4xf32>
    %c2_i32 = arith.constant 2 : i32
    %19 = arith.addi %0, %c2_i32 : i32
    %c0_19 = arith.constant 0 : index
    %20 = arith.index_cast %19 : i32 to index
    %c0_20 = arith.constant 0 : index
    %c0_21 = arith.constant 0 : index
    %21 = vector.load %arg2[%c0_19, %20, %c0_20, %c0_21] : memref<1x18x18x4xf32, #tpu.memory_space<vmem>>, vector<1x4x16x4xf32>
    %c2_i32_22 = arith.constant 2 : i32
    %22 = arith.addi %0, %c2_i32_22 : i32
    %c0_23 = arith.constant 0 : index
    %23 = arith.index_cast %22 : i32 to index
    %c1_24 = arith.constant 1 : index
    %c0_25 = arith.constant 0 : index
    %24 = vector.load %arg2[%c0_23, %23, %c1_24, %c0_25] : memref<1x18x18x4xf32, #tpu.memory_space<vmem>>, vector<1x4x16x4xf32>
    %c2_i32_26 = arith.constant 2 : i32
    %25 = arith.addi %0, %c2_i32_26 : i32
    %c0_27 = arith.constant 0 : index
    %26 = arith.index_cast %25 : i32 to index
    %c2_28 = arith.constant 2 : index
    %c0_29 = arith.constant 0 : index
    %27 = vector.load %arg2[%c0_27, %26, %c2_28, %c0_29] : memref<1x18x18x4xf32, #tpu.memory_space<vmem>>, vector<1x4x16x4xf32>
    %28 = tpu.concatenate %3, %6, %9, %12, %15, %18, %21, %24, %27 in 3 : vector<1x4x16x4xf32>, vector<1x4x16x4xf32>, vector<1x4x16x4xf32>, vector<1x4x16x4xf32>, vector<1x4x16x4xf32>, vector<1x4x16x4xf32>, vector<1x4x16x4xf32>, vector<1x4x16x4xf32>, vector<1x4x16x4xf32> -> vector<1x4x16x36xf32>
    %29 = vector.shape_cast %28 : vector<1x4x16x36xf32> to vector<64x36xf32>
    %c0_30 = arith.constant 0 : index
    %c0_31 = arith.constant 0 : index
    %30 = vector.load %arg3[%c0_30, %c0_31] : memref<36x128xf32, #tpu.memory_space<vmem>>, vector<36x128xf32>
    %cst = arith.constant dense<0.000000e+00> : vector<64x128xf32>
    %31 = tpu.matmul %29, %30, %cst {dimension_numbers = #tpu.dot_dimension_numbers<[1], [0], [0], [1], [0, 0, 1, 1], [], []>} : vector<64x36xf32>, vector<36x128xf32>, vector<64x128xf32> -> vector<64x128xf32>
    %32 = vector.extract_strided_slice %31 {offsets = [0, 0], sizes = [64, 4], strides = [1, 1]} : vector<64x128xf32> to vector<64x4xf32>
    %c0_32 = arith.constant 0 : index
    %c0_33 = arith.constant 0 : index
    %33 = vector.load %arg4[%c0_32, %c0_33] : memref<1x4xf32, #tpu.memory_space<vmem>>, vector<1x4xf32>
    %34 = vector.broadcast %33 : vector<1x4xf32> to vector<64x4xf32>
    %35 = arith.addf %32, %34 : vector<64x4xf32>
    %cst_34 = arith.constant 0.000000e+00 : f32
    %36 = vector.broadcast %cst_34 : f32 to vector<64x4xf32>
    %37 = arith.maximumf %35, %36 : vector<64x4xf32>
    %38 = vector.shape_cast %37 : vector<64x4xf32> to vector<1x4x16x4xf32>
    %c0_35 = arith.constant 0 : index
    %c0_36 = arith.constant 0 : index
    %c0_37 = arith.constant 0 : index
    %c0_38 = arith.constant 0 : index
    %39 = vector.load %arg5[%c0_35, %c0_36, %c0_37, %c0_38] : memref<1x4x16x4xf32, #tpu.memory_space<vmem>>, vector<1x4x16x4xf32>
    tpu.vector_store %arg5[%c0_35, %c0_36, %c0_37, %c0_38], %38 {strides = array<i32>} : memref<1x4x16x4xf32, #tpu.memory_space<vmem>>, vector<1x4x16x4xf32>,
    return
  }
  func.func @transform_0(%arg0: i32, %arg1: i32) -> (i32, i32, i32, i32) {
    %c0_i32 = arith.constant 0 : i32
    %c0_i32_0 = arith.constant 0 : i32
    %c0_i32_1 = arith.constant 0 : i32
    %c0_i32_2 = arith.constant 0 : i32
    return %arg0, %c0_i32, %c0_i32_0, %c0_i32_1 : i32, i32, i32, i32
  }
  func.func @transform_1(%arg0: i32, %arg1: i32) -> (i32, i32) {
    %c0_i32 = arith.constant 0 : i32
    %c0_i32_0 = arith.constant 0 : i32
    %c0_i32_1 = arith.constant 0 : i32
    return %c0_i32, %c0_i32_0 : i32, i32
  }
  func.func @transform_2(%arg0: i32, %arg1: i32) -> (i32, i32) {
    %c0_i32 = arith.constant 0 : i32
    %c0_i32_0 = arith.constant 0 : i32
    %c0_i32_1 = arith.constant 0 : i32
    return %c0_i32, %c0_i32_0 : i32, i32
  }
  func.func @transform_3(%arg0: i32, %arg1: i32) -> (i32, i32, i32, i32) {
    %c0_i32 = arith.constant 0 : i32
    %c0_i32_0 = arith.constant 0 : i32
    %c0_i32_1 = arith.constant 0 : i32
    return %arg0, %arg1, %c0_i32, %c0_i32_0 : i32, i32, i32, i32
  }
}

</mosaic_0001>

<llo_original>
// kernel: tpu_custom_call.1
$region0: #{tpu_custom_call.1}
  #allocation0 [shape = 'u32[]', space=smem, size = 0x4, offset = 0x4, fixed_abs, tag = 'smem constant byte address 0x4 - core index']
  #allocation1 [shape = 'u32[72,128]{1,0:T(1,128)}', space=vmem, size = 0x9000, scoped, tag = 'internal scratch']
  %s0 = inlined_call_operand.vmem [shape: f32[2,18,18,4], index: 0, kind: input, shape index: {}]
  %s1 = inlined_call_operand.vmem [shape: f32[36,128], index: 1, kind: input, shape index: {}]
  %s2 = inlined_call_operand.vmem [shape: f32[1,4], index: 2, kind: input, shape index: {}]
  %s3 = inlined_call_operand.vmem [shape: f32[2,16,16,4], index: 3, kind: output, shape index: {}]
  %s4 = sld [smem:[#allocation0]]
  $region45: #{tpu_custom_call.1} parent=0
    _
  %s6 = ssub.s32 1, %s4
  %s7 = scalar_select 0, %s6, %s4
  loop: start=0, step=1, limit=10
  $region2: #{tpu_custom_call.1} parent=0 // loop_pre_header
    _
  $region3: #{tpu_custom_call.1} parent=0 // loop_header
    %s9 = sphi 0, %s13
    %p10 = scmp.ge.s32.totalorder %s9, 10
    %s16 = sphi 0, %s28
    %s17 = sphi 0, %s24
    %s18 = sphi 0, %s16
    %s19 = sphi 0, %s17
    %s20 = sphi 0, %s18
    %s21 = sphi 0, %s19
    %s31 = sphi 0, %s33
    %s34 = sphi 0, %s31
    %s35 = sphi 0, %s34
    %s51 = sphi 0, %s35
    %s55 = sphi 0, %s55
    %s57 = sphi 0, %s55
    %s58 = sphi 0, %s57
    %s72 = sphi 0, %s58
    %s76 = sphi 0, %s76
    %s78 = sphi 0, %s76
    %s79 = sphi 0, %s78
    %s93 = sphi 0, %s79
    %s101 = sphi 0, %s103
    %s104 = sphi 0, %s101
    %s105 = sphi 0, %s104
    %s121 = sphi 0, %s105
  $region4: #{tpu_custom_call.1} parent=0 // loop_header_branch
    %12 = sbr.rel (%p10) target = $region8
  $region5: #{tpu_custom_call.1} parent=0 // loop_body
    %s14 = ssub.s32 %s9, 1
    %s15 = ssub.s32 %s9, 2
    %s22 = sadd.s32 1, %s17
    %p23 = scmp.ge.s32.totalorder %s22, 4
    %s24 = scalar_select %p23, 0, %s22
    %s25 = sadd.s32 1, %s16
    %s26 = scalar_select %p23, %s25, %s16
    %p27 = scmp.ge.s32.totalorder %s26, 2
    %s28 = scalar_select %p27, 0, %s26
    %s29 = ssub.s32 %s16, %s28
    %p30 = scmp.eq.s32.totalorder %s29, 0
    %s32 = sadd.s32 %s31, 1
    %s33 = scalar_select %p30, %s31, %s32
    %p36 = pneg %p30
    %p37 = scmp.eq.s32.totalorder %s9, 7
    %p38 = por %p36, %p37
    %p39 = scmp.ne.s32.totalorder %s31, %s34
    %p40 = scmp.eq.s32.totalorder %s9, 0
    %p41 = por %p39, %p40
    %p42 = scmp.ne.s32.totalorder %s31, %s34
    %p43 = scmp.eq.s32.totalorder %s14, 7
    %p44 = por %p42, %p43
    %p45 = scmp.ne.s32.totalorder %s34, %s35
    %p46 = scmp.eq.s32.totalorder %s14, 0
    %p47 = por %p45, %p46
    %p48 = scmp.ne.s32.totalorder %s34, %s35
    %p49 = scmp.eq.s32.totalorder %s15, 7
    %p50 = por %p48, %p49
    %p52 = scmp.ne.s32.totalorder %s35, %s51
    %p53 = scmp.eq.s32.totalorder %s15, 0
    %p54 = por %p52, %p53
    %s56 = sadd.s32 %s55, 1
    %p59 = scmp.eq.s32.totalorder %s9, 7
    %p60 = scmp.ne.s32.totalorder %s55, %s57
    %p61 = scmp.eq.s32.totalorder %s9, 0
    %p62 = por %p60, %p61
    %p63 = scmp.ne.s32.totalorder %s55, %s57
    %p64 = scmp.eq.s32.totalorder %s14, 7
    %p65 = por %p63, %p64
    %p66 = scmp.ne.s32.totalorder %s57, %s58
    %p67 = scmp.eq.s32.totalorder %s14, 0
    %p68 = por %p66, %p67
    %p69 = scmp.ne.s32.totalorder %s57, %s58
    %p70 = scmp.eq.s32.totalorder %s15, 7
    %p71 = por %p69, %p70
    %p73 = scmp.ne.s32.totalorder %s58, %s72
    %p74 = scmp.eq.s32.totalorder %s15, 0
    %p75 = por %p73, %p74
    %s77 = sadd.s32 %s76, 1
    %p80 = scmp.eq.s32.totalorder %s9, 7
    %p81 = scmp.ne.s32.totalorder %s76, %s78
    %p82 = scmp.eq.s32.totalorder %s9, 0
    %p83 = por %p81, %p82
    %p84 = scmp.ne.s32.totalorder %s76, %s78
    %p85 = scmp.eq.s32.totalorder %s14, 7
    %p86 = por %p84, %p85
    %p87 = scmp.ne.s32.totalorder %s78, %s79
    %p88 = scmp.eq.s32.totalorder %s14, 0
    %p89 = por %p87, %p88
    %p90 = scmp.ne.s32.totalorder %s78, %s79
    %p91 = scmp.eq.s32.totalorder %s15, 7
    %p92 = por %p90, %p91
    %p94 = scmp.ne.s32.totalorder %s79, %s93
    %p95 = scmp.eq.s32.totalorder %s15, 0
    %p96 = por %p94, %p95
    %s97 = ssub.s32 %s16, %s28
    %s98 = ssub.s32 %s17, %s24
    %s99 = sor.u32 %s97, %s98
    %p100 = scmp.eq.s32.totalorder %s99, 0
    %s102 = sadd.s32 %s101, 1
    %s103 = scalar_select %p100, %s101, %s102
    %p106 = pneg %p100
    %p107 = scmp.eq.s32.totalorder %s9, 7
    %p108 = por %p106, %p107
    %p109 = scmp.ne.s32.totalorder %s101, %s104
    %p110 = scmp.eq.s32.totalorder %s9, 0
    %p111 = por %p109, %p110
    %p112 = scmp.ne.s32.totalorder %s101, %s104
    %p113 = scmp.eq.s32.totalorder %s14, 7
    %p114 = por %p112, %p113
    %p115 = scmp.ne.s32.totalorder %s104, %s105
    %p116 = scmp.eq.s32.totalorder %s14, 0
    %p117 = por %p115, %p116
    %p118 = scmp.ne.s32.totalorder %s104, %s105
    %p119 = scmp.eq.s32.totalorder %s15, 7
    %p120 = por %p118, %p119
    %p122 = scmp.ne.s32.totalorder %s105, %s121
    %p123 = scmp.eq.s32.totalorder %s15, 0
    %p124 = por %p122, %p123
    %p125 = scmp.le.s32.totalorder 1, %s9
    %p126 = scmp.lt.s32.totalorder %s9, 9
    %p127 = pnand %p125, %p126
    %p128 = pneg %p127
    // Predicated region
    $region9: #{tpu_custom_call.1} parent=5 // pred_check
      _
    $region10: #{tpu_custom_call.1} parent=5 // pred_check_branch
      %130 = sbr.rel (%p127) target = $region12
    $region11: #{tpu_custom_call.1} parent=5 // pred_region
      %s131 = ssub.s32 %s9, 1
      // Predicated region
      $region13: #{tpu_custom_call.1} parent=11 // pred_check
        %p132 = pneg %p68
      $region14: #{tpu_custom_call.1} parent=11 // pred_check_branch
        %134 = sbr.rel (%p132) target = $region16
      $region15: #{tpu_custom_call.1} parent=11 // pred_region
        _
      $region16: #{tpu_custom_call.1} parent=11 // pred_fallthru
        _
      // Predicated region
      $region17: #{tpu_custom_call.1} parent=11 // pred_check
        %p135 = pneg %p89
      $region18: #{tpu_custom_call.1} parent=11 // pred_check_branch
        %137 = sbr.rel (%p135) target = $region20
      $region19: #{tpu_custom_call.1} parent=11 // pred_region
        _
      $region20: #{tpu_custom_call.1} parent=11 // pred_fallthru
        _
    $region12: #{tpu_custom_call.1} parent=5 // pred_fallthru
      _
    %p138 = scmp.lt.s32.totalorder %s9, 8
    // Predicated region
    $region21: #{tpu_custom_call.1} parent=5 // pred_check
      %p139 = pneg %p138
    $region22: #{tpu_custom_call.1} parent=5 // pred_check_branch
      %141 = sbr.rel (%p139) target = $region24
    $region23: #{tpu_custom_call.1} parent=5 // pred_region
      // Predicated region
      $region25: #{tpu_custom_call.1} parent=23 // pred_check
        %p142 = pneg %p41
      $region26: #{tpu_custom_call.1} parent=23 // pred_check_branch
        %144 = sbr.rel (%p142) target = $region28
      $region27: #{tpu_custom_call.1} parent=23 // pred_region
        %p145 = scmp.lt.s32.totalorder %s16, 1
        %s146 = scalar_select %p145, %s16, 1
        %s147 = smul.addr %s146, 54
        %s148 = smul.addr %s147, 8
        %s149 = scalar_lea.vmem %s0, %s148
      $region28: #{tpu_custom_call.1} parent=23 // pred_fallthru
        _
    $region24: #{tpu_custom_call.1} parent=5 // pred_fallthru
      _
    %p150 = scmp.le.s32.totalorder 1, %s9
    %p151 = scmp.lt.s32.totalorder %s9, 9
    %p152 = pnand %p150, %p151
    %p153 = pneg %p152
    // Predicated region
    $region29: #{tpu_custom_call.1} parent=5 // pred_check
      _
    $region30: #{tpu_custom_call.1} parent=5 // pred_check_branch
      %155 = sbr.rel (%p152) target = $region32
    $region31: #{tpu_custom_call.1} parent=5 // pred_region
      %s156 = ssub.s32 %s9, 1
      %p157 = scmp.lt.s32.totalorder %s18, 1
      %s158 = scalar_select %p157, %s18, 1
      %s159 = smul.addr %s158, 54
      %s160 = smul.addr %s159, 8
      %s161 = scalar_lea.vmem %s0, %s160
      %p162 = pneg %p47
      %p163 = pneg %p44
      %p164 = pneg %p68
      %p165 = pneg %p65
      %p166 = pneg %p89
      %p167 = pneg %p86
      %p168 = pneg %p117
      %p169 = pneg %p114
      %s170 = smul.u32 4, %s19
      %p171 = scmp.lt.s32.totalorder %s18, 1
      %s172 = scalar_select %p171, %s18, 1
      %p173 = scmp.lt.s32.totalorder %s170, 15
      %s174 = scalar_select %p173, %s170, 15
      %s175 = smul.addr %s174, 2
      %s176 = smul.addr %s172, 32
      %s177 = sadd.s32 %s175, %s176
      %s178 = smul.addr %s177, 8
      %s179 = scalar_lea.vmem %s3, %s178
      %p180 = scmp.lt.s32.totalorder %s18, 1
      %s181 = scalar_select %p180, %s18, 1
      %s182 = smul.addr %s181, 54
      %s183 = smul.addr %s182, 8
      %s184 = scalar_lea.vmem %s0, %s183
      %s185 = smul.u32 4, %s19
      %p186 = scmp.lt.s32.totalorder %s18, 1
      %s187 = scalar_select %p186, %s18, 1
      %p188 = scmp.lt.s32.totalorder %s185, 15
      %s189 = scalar_select %p188, %s185, 15
      %s190 = smul.addr %s189, 2
      %s191 = smul.addr %s187, 32
      %s192 = sadd.s32 %s190, %s191
      %s193 = smul.addr %s192, 8
      %s194 = scalar_lea.vmem %s3, %s193
      %s195 = smul.u32 4, %s19
      %s196 = smul.u32 %s19, 4
      %s197 = smul.u32 %s196, 24
      %s198 = scalar_lea.vmem %s184, %s197
      %v199 = vld [vmem:[%s198] sm:$0xff]
      %v200 = vld [vmem:[%s198 + $0x8] sm:$0xff]
      %v201 = vld [vmem:[%s198 + $0x18] sm:$0xff]
      %v202 = vld [vmem:[%s198 + $0x20] sm:$0xff]
      %v203 = vld [vmem:[%s198 + $0x30] sm:$0xff]
      %v204 = vld [vmem:[%s198 + $0x38] sm:$0xff]
      %v205 = vld [vmem:[%s198 + $0x48] sm:$0xff]
      %v206 = vld [vmem:[%s198 + $0x50] sm:$0xff]
      %v207 = vld [vmem:[%s198 + $0x1] sm:$0xff]
      %v208 = vld [vmem:[%s198 + $0x9] sm:$0xff]
      %v209 = vld [vmem:[%s198 + $0x19] sm:$0xff]
      %v210 = vld [vmem:[%s198 + $0x21] sm:$0xff]
      %v211 = vld [vmem:[%s198 + $0x31] sm:$0xff]
      %v212 = vld [vmem:[%s198 + $0x39] sm:$0xff]
      %v213 = vld [vmem:[%s198 + $0x49] sm:$0xff]
      %v214 = vld [vmem:[%s198 + $0x51] sm:$0xff]
      %v215 = vld [vmem:[%s198 + $0x2] sm:$0xff]
      %v216 = vld [vmem:[%s198 + $0xa] sm:$0xff]
      %v217 = vld [vmem:[%s198 + $0x1a] sm:$0xff]
      %v218 = vld [vmem:[%s198 + $0x22] sm:$0xff]
      %v219 = vld [vmem:[%s198 + $0x32] sm:$0xff]
      %v220 = vld [vmem:[%s198 + $0x3a] sm:$0xff]
      %v221 = vld [vmem:[%s198 + $0x4a] sm:$0xff]
      %v222 = vld [vmem:[%s198 + $0x52] sm:$0xff]
      %s223 = sadd.s32 %s196, 1
      %s224 = smul.u32 %s223, 24
      %s225 = scalar_lea.vmem %s184, %s224
      %v226 = vld [vmem:[%s225] sm:$0xff]
      %v227 = vld [vmem:[%s225 + $0x8] sm:$0xff]
      %v228 = vld [vmem:[%s225 + $0x18] sm:$0xff]
      %v229 = vld [vmem:[%s225 + $0x20] sm:$0xff]
      %v230 = vld [vmem:[%s225 + $0x30] sm:$0xff]
      %v231 = vld [vmem:[%s225 + $0x38] sm:$0xff]
      %v232 = vld [vmem:[%s225 + $0x48] sm:$0xff]
      %v233 = vld [vmem:[%s225 + $0x50] sm:$0xff]
      %v234 = vld [vmem:[%s225 + $0x1] sm:$0xff]
      %v235 = vld [vmem:[%s225 + $0x9] sm:$0xff]
      %v236 = vld [vmem:[%s225 + $0x19] sm:$0xff]
      %v237 = vld [vmem:[%s225 + $0x21] sm:$0xff]
      %v238 = vld [vmem:[%s225 + $0x31] sm:$0xff]
      %v239 = vld [vmem:[%s225 + $0x39] sm:$0xff]
      %v240 = vld [vmem:[%s225 + $0x49] sm:$0xff]
      %v241 = vld [vmem:[%s225 + $0x51] sm:$0xff]
      %v242 = vld [vmem:[%s225 + $0x2] sm:$0xff]
      %v243 = vld [vmem:[%s225 + $0xa] sm:$0xff]
      %v244 = vld [vmem:[%s225 + $0x1a] sm:$0xff]
      %v245 = vld [vmem:[%s225 + $0x22] sm:$0xff]
      %v246 = vld [vmem:[%s225 + $0x32] sm:$0xff]
      %v247 = vld [vmem:[%s225 + $0x3a] sm:$0xff]
      %v248 = vld [vmem:[%s225 + $0x4a] sm:$0xff]
      %v249 = vld [vmem:[%s225 + $0x52] sm:$0xff]
      %s250 = sadd.s32 %s196, 2
      %s251 = smul.u32 %s250, 24
      %s252 = scalar_lea.vmem %s184, %s251
      %v253 = vld [vmem:[%s252] sm:$0xff]
      %v254 = vld [vmem:[%s252 + $0x8] sm:$0xff]
      %v255 = vld [vmem:[%s252 + $0x18] sm:$0xff]
      %v256 = vld [vmem:[%s252 + $0x20] sm:$0xff]
      %v257 = vld [vmem:[%s252 + $0x30] sm:$0xff]
      %v258 = vld [vmem:[%s252 + $0x38] sm:$0xff]
      %v259 = vld [vmem:[%s252 + $0x48] sm:$0xff]
      %v260 = vld [vmem:[%s252 + $0x50] sm:$0xff]
      %v261 = vld [vmem:[%s252 + $0x1] sm:$0xff]
      %v262 = vld [vmem:[%s252 + $0x9] sm:$0xff]
      %v263 = vld [vmem:[%s252 + $0x19] sm:$0xff]
      %v264 = vld [vmem:[%s252 + $0x21] sm:$0xff]
      %v265 = vld [vmem:[%s252 + $0x31] sm:$0xff]
      %v266 = vld [vmem:[%s252 + $0x39] sm:$0xff]
      %v267 = vld [vmem:[%s252 + $0x49] sm:$0xff]
      %v268 = vld [vmem:[%s252 + $0x51] sm:$0xff]
      %v269 = vld [vmem:[%s252 + $0x2] sm:$0xff]
      %v270 = vld [vmem:[%s252 + $0xa] sm:$0xff]
      %v271 = vld [vmem:[%s252 + $0x1a] sm:$0xff]
      %v272 = vld [vmem:[%s252 + $0x22] sm:$0xff]
      %v273 = vld [vmem:[%s252 + $0x32] sm:$0xff]
      %v274 = vld [vmem:[%s252 + $0x3a] sm:$0xff]
      %v275 = vld [vmem:[%s252 + $0x4a] sm:$0xff]
      %v276 = vld [vmem:[%s252 + $0x52] sm:$0xff]
      %285 = vrot.lane.b32.xlu0 %v207, 4
      %v286 = vpop.permute.xlu0 %285
      %287 = vrot.lane.b32.xlu0 %v208, 4
      %v288 = vpop.permute.xlu0 %287
      %289 = vrot.lane.b32.xlu0 %v209, 4
      %v290 = vpop.permute.xlu0 %289
      %291 = vrot.lane.b32.xlu0 %v210, 4
      %v292 = vpop.permute.xlu0 %291
      %293 = vrot.lane.b32.xlu0 %v211, 4
      %v294 = vpop.permute.xlu0 %293
      %295 = vrot.lane.b32.xlu0 %v212, 4
      %v296 = vpop.permute.xlu0 %295
      %297 = vrot.lane.b32.xlu0 %v213, 4
      %v298 = vpop.permute.xlu0 %297
      %299 = vrot.lane.b32.xlu0 %v214, 4
      %v300 = vpop.permute.xlu0 %299
      %317 = vrot.lane.b32.xlu0 %v215, 8
      %v318 = vpop.permute.xlu0 %317
      %319 = vrot.lane.b32.xlu0 %v216, 8
      %v320 = vpop.permute.xlu0 %319
      %321 = vrot.lane.b32.xlu0 %v217, 8
      %v322 = vpop.permute.xlu0 %321
      %323 = vrot.lane.b32.xlu0 %v218, 8
      %v324 = vpop.permute.xlu0 %323
      %325 = vrot.lane.b32.xlu0 %v219, 8
      %v326 = vpop.permute.xlu0 %325
      %327 = vrot.lane.b32.xlu0 %v220, 8
      %v328 = vpop.permute.xlu0 %327
      %329 = vrot.lane.b32.xlu0 %v221, 8
      %v330 = vpop.permute.xlu0 %329
      %331 = vrot.lane.b32.xlu0 %v222, 8
      %v332 = vpop.permute.xlu0 %331
      %349 = vrot.lane.b32.xlu0 %v226, 12
      %v350 = vpop.permute.xlu0 %349
      %351 = vrot.lane.b32.xlu0 %v227, 12
      %v352 = vpop.permute.xlu0 %351
      %353 = vrot.lane.b32.xlu0 %v228, 12
      %v354 = vpop.permute.xlu0 %353
      %355 = vrot.lane.b32.xlu0 %v229, 12
      %v356 = vpop.permute.xlu0 %355
      %357 = vrot.lane.b32.xlu0 %v230, 12
      %v358 = vpop.permute.xlu0 %357
      %359 = vrot.lane.b32.xlu0 %v231, 12
      %v360 = vpop.permute.xlu0 %359
      %361 = vrot.lane.b32.xlu0 %v232, 12
      %v362 = vpop.permute.xlu0 %361
      %363 = vrot.lane.b32.xlu0 %v233, 12
      %v364 = vpop.permute.xlu0 %363
      %381 = vrot.lane.b32.xlu0 %v234, 16
      %v382 = vpop.permute.xlu0 %381
      %383 = vrot.lane.b32.xlu0 %v235, 16
      %v384 = vpop.permute.xlu0 %383
      %385 = vrot.lane.b32.xlu0 %v236, 16
      %v386 = vpop.permute.xlu0 %385
      %387 = vrot.lane.b32.xlu0 %v237, 16
      %v388 = vpop.permute.xlu0 %387
      %389 = vrot.lane.b32.xlu0 %v238, 16
      %v390 = vpop.permute.xlu0 %389
      %391 = vrot.lane.b32.xlu0 %v239, 16
      %v392 = vpop.permute.xlu0 %391
      %393 = vrot.lane.b32.xlu0 %v240, 16
      %v394 = vpop.permute.xlu0 %393
      %395 = vrot.lane.b32.xlu0 %v241, 16
      %v396 = vpop.permute.xlu0 %395
      %413 = vrot.lane.b32.xlu0 %v242, 20
      %v414 = vpop.permute.xlu0 %413
      %415 = vrot.lane.b32.xlu0 %v243, 20
      %v416 = vpop.permute.xlu0 %415
      %417 = vrot.lane.b32.xlu0 %v244, 20
      %v418 = vpop.permute.xlu0 %417
      %419 = vrot.lane.b32.xlu0 %v245, 20
      %v420 = vpop.permute.xlu0 %419
      %421 = vrot.lane.b32.xlu0 %v246, 20
      %v422 = vpop.permute.xlu0 %421
      %423 = vrot.lane.b32.xlu0 %v247, 20
      %v424 = vpop.permute.xlu0 %423
      %425 = vrot.lane.b32.xlu0 %v248, 20
      %v426 = vpop.permute.xlu0 %425
      %427 = vrot.lane.b32.xlu0 %v249, 20
      %v428 = vpop.permute.xlu0 %427
      %445 = vrot.lane.b32.xlu0 %v253, 24
      %v446 = vpop.permute.xlu0 %445
      %447 = vrot.lane.b32.xlu0 %v254, 24
      %v448 = vpop.permute.xlu0 %447
      %449 = vrot.lane.b32.xlu0 %v255, 24
      %v450 = vpop.permute.xlu0 %449
      %451 = vrot.lane.b32.xlu0 %v256, 24
      %v452 = vpop.permute.xlu0 %451
      %453 = vrot.lane.b32.xlu0 %v257, 24
      %v454 = vpop.permute.xlu0 %453
      %455 = vrot.lane.b32.xlu0 %v258, 24
      %v456 = vpop.permute.xlu0 %455
      %457 = vrot.lane.b32.xlu0 %v259, 24
      %v458 = vpop.permute.xlu0 %457
      %459 = vrot.lane.b32.xlu0 %v260, 24
      %v460 = vpop.permute.xlu0 %459
      %477 = vrot.lane.b32.xlu0 %v261, 28
      %v478 = vpop.permute.xlu0 %477
      %479 = vrot.lane.b32.xlu0 %v262, 28
      %v480 = vpop.permute.xlu0 %479
      %481 = vrot.lane.b32.xlu0 %v263, 28
      %v482 = vpop.permute.xlu0 %481
      %483 = vrot.lane.b32.xlu0 %v264, 28
      %v484 = vpop.permute.xlu0 %483
      %485 = vrot.lane.b32.xlu0 %v265, 28
      %v486 = vpop.permute.xlu0 %485
      %487 = vrot.lane.b32.xlu0 %v266, 28
      %v488 = vpop.permute.xlu0 %487
      %489 = vrot.lane.b32.xlu0 %v267, 28
      %v490 = vpop.permute.xlu0 %489
      %491 = vrot.lane.b32.xlu0 %v268, 28
      %v492 = vpop.permute.xlu0 %491
      %509 = vrot.lane.b32.xlu0 %v269, 32
      %v510 = vpop.permute.xlu0 %509
      %511 = vrot.lane.b32.xlu0 %v270, 32
      %v512 = vpop.permute.xlu0 %511
      %513 = vrot.lane.b32.xlu0 %v271, 32
      %v514 = vpop.permute.xlu0 %513
      %515 = vrot.lane.b32.xlu0 %v272, 32
      %v516 = vpop.permute.xlu0 %515
      %517 = vrot.lane.b32.xlu0 %v273, 32
      %v518 = vpop.permute.xlu0 %517
      %519 = vrot.lane.b32.xlu0 %v274, 32
      %v520 = vpop.permute.xlu0 %519
      %521 = vrot.lane.b32.xlu0 %v275, 32
      %v522 = vpop.permute.xlu0 %521
      %523 = vrot.lane.b32.xlu0 %v276, 32
      %v524 = vpop.permute.xlu0 %523
      %vm533 = vcmask 31744
      %v534 = vsel %vm533, %v199, %v286
      %v535 = vsel %vm533, %v200, %v288
      %v536 = vsel %vm533, %v201, %v290
      %v537 = vsel %vm533, %v202, %v292
      %v538 = vsel %vm533, %v203, %v294
      %v539 = vsel %vm533, %v204, %v296
      %v540 = vsel %vm533, %v205, %v298
      %v541 = vsel %vm533, %v206, %v300
      %vm542 = vcmask 64512
      %v543 = vsel %vm542, %v534, %v318
      %v544 = vsel %vm542, %v535, %v320
      %v545 = vsel %vm542, %v536, %v322
      %v546 = vsel %vm542, %v537, %v324
      %v547 = vsel %vm542, %v538, %v326
      %v548 = vsel %vm542, %v539, %v328
      %v549 = vsel %vm542, %v540, %v330
      %v550 = vsel %vm542, %v541, %v332
      %vm551 = vcmask 97280
      %v552 = vsel %vm551, %v543, %v350
      %v553 = vsel %vm551, %v544, %v352
      %v554 = vsel %vm551, %v545, %v354
      %v555 = vsel %vm551, %v546, %v356
      %v556 = vsel %vm551, %v547, %v358
      %v557 = vsel %vm551, %v548, %v360
      %v558 = vsel %vm551, %v549, %v362
      %v559 = vsel %vm551, %v550, %v364
      %vm560 = vcmask 130048
      %v561 = vsel %vm560, %v552, %v382
      %v562 = vsel %vm560, %v553, %v384
      %v563 = vsel %vm560, %v554, %v386
      %v564 = vsel %vm560, %v555, %v388
      %v565 = vsel %vm560, %v556, %v390
      %v566 = vsel %vm560, %v557, %v392
      %v567 = vsel %vm560, %v558, %v394
      %v568 = vsel %vm560, %v559, %v396
      %vm569 = vcmask 162816
      %v570 = vsel %vm569, %v561, %v414
      %v571 = vsel %vm569, %v562, %v416
      %v572 = vsel %vm569, %v563, %v418
      %v573 = vsel %vm569, %v564, %v420
      %v574 = vsel %vm569, %v565, %v422
      %v575 = vsel %vm569, %v566, %v424
      %v576 = vsel %vm569, %v567, %v426
      %v577 = vsel %vm569, %v568, %v428
      %vm578 = vcmask 195584
      %v579 = vsel %vm578, %v570, %v446
      %v580 = vsel %vm578, %v571, %v448
      %v581 = vsel %vm578, %v572, %v450
      %v582 = vsel %vm578, %v573, %v452
      %v583 = vsel %vm578, %v574, %v454
      %v584 = vsel %vm578, %v575, %v456
      %v585 = vsel %vm578, %v576, %v458
      %v586 = vsel %vm578, %v577, %v460
      %vm587 = vcmask 228352
      %v588 = vsel %vm587, %v579, %v478
      %v589 = vsel %vm587, %v580, %v480
      %v590 = vsel %vm587, %v581, %v482
      %v591 = vsel %vm587, %v582, %v484
      %v592 = vsel %vm587, %v583, %v486
      %v593 = vsel %vm587, %v584, %v488
      %v594 = vsel %vm587, %v585, %v490
      %v595 = vsel %vm587, %v586, %v492
      %vm596 = vcmask 261120
      %v597 = vsel %vm596, %v588, %v510
      %v598 = vsel %vm596, %v589, %v512
      %v599 = vsel %vm596, %v590, %v514
      %v600 = vsel %vm596, %v591, %v516
      %v601 = vsel %vm596, %v592, %v518
      %v602 = vsel %vm596, %v593, %v520
      %v603 = vsel %vm596, %v594, %v522
      %v604 = vsel %vm596, %v595, %v524
      %v605 = vld [vmem:[%s1] sm:$0xff]
      %v606 = vld [vmem:[%s1 + $0x8] sm:$0xff]
      %v607 = vld [vmem:[%s1 + $0x10] sm:$0xff]
      %v608 = vld [vmem:[%s1 + $0x18] sm:$0xff]
      %v609 = vld [vmem:[%s1 + $0x20] sm:$0xf]
      %vm610 = vcmask 293888
      %v612 = vsel %vm610, %v597, 0
      %v615 = vsel %vm610, %v598, 0
      %v618 = vsel %vm610, %v599, 0
      %v621 = vsel %vm610, %v600, 0
      %v624 = vsel %vm610, %v601, 0
      %v627 = vsel %vm610, %v602, 0
      %v630 = vsel %vm610, %v603, 0
      %v633 = vsel %vm610, %v604, 0
      %vm635 = vcmask 1043456
      %v637 = vsel %vm635, %v609, 0
      %639 = vmatpush.msra.mxu0 0.0
      %640 = vmatpush.msra.mxu0 0.0
      %641 = vmatpush.msra.mxu0 0.0
      %642 = vmatpush.msra.mxu0 0.0
      %643 = vmatpush.msra.mxu0 0.0
      %644 = vmatpush.msra.mxu0 0.0
      %645 = vmatpush.msra.mxu0 0.0
      %646 = vmatpush.msra.mxu0 0.0
      %647 = vmatpush.msra.mxu0 0.0
      %648 = vmatpush.msra.mxu0 0.0
      %649 = vmatpush.msra.mxu0 0.0
      %650 = vmatpush.msra.mxu0 %v637
      %651 = vmatpush.msra.mxu0 %v608
      %652 = vmatpush.msra.mxu0 %v607
      %653 = vmatpush.msra.mxu0 %v606
      %654 = vmatpush.msra.mxu0 %v605
      %655 = vmatmul.f32.gmra.mxu0 %v612
      %v656 = vpop.f32.mrf.mxu0
      %v657 = vadd.f32 0.0, %v656
      %658 = vmatmul.f32.gmra.mxu0 %v615
      %v659 = vpop.f32.mrf.mxu0
      %v660 = vadd.f32 0.0, %v659
      %661 = vmatmul.f32.gmra.mxu0 %v618
      %v662 = vpop.f32.mrf.mxu0
      %v663 = vadd.f32 0.0, %v662
      %664 = vmatmul.f32.gmra.mxu0 %v621
      %v665 = vpop.f32.mrf.mxu0
      %v666 = vadd.f32 0.0, %v665
      %667 = vmatmul.f32.gmra.mxu0 %v624
      %v668 = vpop.f32.mrf.mxu0
      %v669 = vadd.f32 0.0, %v668
      %670 = vmatmul.f32.gmra.mxu0 %v627
      %v671 = vpop.f32.mrf.mxu0
      %v672 = vadd.f32 0.0, %v671
      %673 = vmatmul.f32.gmra.mxu0 %v630
      %v674 = vpop.f32.mrf.mxu0
      %v675 = vadd.f32 0.0, %v674
      %676 = vmatmul.f32.gmra.mxu0 %v633
      %v677 = vpop.f32.mrf.mxu0
      %v678 = vadd.f32 0.0, %v677
      %679 = vdwg.mxu0
      %v680 = vld [vmem:[%s2] sm:$0x1]
      %v682 = vperm.slane %v680, 0
      %v684 = vadd.f32 %v657, %v682
      %v685 = vadd.f32 %v660, %v682
      %v686 = vadd.f32 %v663, %v682
      %v687 = vadd.f32 %v666, %v682
      %v688 = vadd.f32 %v669, %v682
      %v689 = vadd.f32 %v672, %v682
      %v690 = vadd.f32 %v675, %v682
      %v691 = vadd.f32 %v678, %v682
      %v692 = vmax.f32 %v684, 0.0
      %v693 = vmax.f32 %v685, 0.0
      %v694 = vmax.f32 %v686, 0.0
      %v695 = vmax.f32 %v687, 0.0
      %v696 = vmax.f32 %v688, 0.0
      %v697 = vmax.f32 %v689, 0.0
      %v698 = vmax.f32 %v690, 0.0
      %v699 = vmax.f32 %v691, 0.0
      %700 = vst.msk [vmem:[%s194] sm:$0xff] %vm533, %v692
      %701 = vst.msk [vmem:[%s194 + $0x8] sm:$0xff] %vm533, %v693
      %702 = vst.msk [vmem:[%s194 + $0x10] sm:$0xff] %vm533, %v694
      %703 = vst.msk [vmem:[%s194 + $0x18] sm:$0xff] %vm533, %v695
      %704 = vst.msk [vmem:[%s194 + $0x20] sm:$0xff] %vm533, %v696
      %705 = vst.msk [vmem:[%s194 + $0x28] sm:$0xff] %vm533, %v697
      %706 = vst.msk [vmem:[%s194 + $0x30] sm:$0xff] %vm533, %v698
      %707 = vst.msk [vmem:[%s194 + $0x38] sm:$0xff] %vm533, %v699
      %s708 = smul.u32 4, %s19
      %p709 = scmp.lt.s32.totalorder %s18, 1
      %s710 = scalar_select %p709, %s18, 1
      %p711 = scmp.lt.s32.totalorder %s708, 15
      %s712 = scalar_select %p711, %s708, 15
      %s713 = smul.addr %s712, 2
      %s714 = smul.addr %s710, 32
      %s715 = sadd.s32 %s713, %s714
      %s716 = smul.addr %s715, 8
      %s717 = scalar_lea.vmem %s3, %s716
      // Predicated region
      $region33: #{tpu_custom_call.1} parent=31 // pred_check
        %p718 = pneg %p114
      $region34: #{tpu_custom_call.1} parent=31 // pred_check_branch
        %720 = sbr.rel (%p718) target = $region36
      $region35: #{tpu_custom_call.1} parent=31 // pred_region
        %s721 = smul.u32 4, %s19
      $region36: #{tpu_custom_call.1} parent=31 // pred_fallthru
        _
    $region32: #{tpu_custom_call.1} parent=5 // pred_fallthru
      _
    %p722 = scmp.le.s32.totalorder 2, %s9
    // Predicated region
    $region37: #{tpu_custom_call.1} parent=5 // pred_check
      %p723 = pneg %p722
    $region38: #{tpu_custom_call.1} parent=5 // pred_check_branch
      %725 = sbr.rel (%p723) target = $region40
    $region39: #{tpu_custom_call.1} parent=5 // pred_region
      %s726 = ssub.s32 %s9, 2
      // Predicated region
      $region41: #{tpu_custom_call.1} parent=39 // pred_check
        %p727 = pneg %p120
      $region42: #{tpu_custom_call.1} parent=39 // pred_check_branch
        %729 = sbr.rel (%p727) target = $region44
      $region43: #{tpu_custom_call.1} parent=39 // pred_region
        %s730 = smul.u32 4, %s21
        %p731 = scmp.lt.s32.totalorder %s20, 1
        %s732 = scalar_select %p731, %s20, 1
        %p733 = scmp.lt.s32.totalorder %s730, 15
        %s734 = scalar_select %p733, %s730, 15
        %s735 = smul.addr %s734, 2
        %s736 = smul.addr %s732, 32
        %s737 = sadd.s32 %s735, %s736
        %s738 = smul.addr %s737, 8
        %s739 = scalar_lea.vmem %s3, %s738
      $region44: #{tpu_custom_call.1} parent=39 // pred_fallthru
        _
    $region40: #{tpu_custom_call.1} parent=5 // pred_fallthru
      _
  $region6: #{tpu_custom_call.1} parent=0 // loop_footer
    %s13 = sadd.s32 1, %s9
  $region7: #{tpu_custom_call.1} parent=0 // loop_footer_branch
    %8 = sbr.rel target = $region3
  $region8: #{tpu_custom_call.1} parent=0 // loop_exit
    _

</llo_original>
